<compile_context>
chip_gen: v7x
topology: tpu7x:2x2x1
jax: 0.10.0
libtpu: 0.0.40
codegen_flags: <defaults>
</compile_context>

<pallas_src>
from functools import partial

import numpy as np
import jax
import jax.numpy as jnp
from jax.experimental import pallas as pl
from jax.experimental.pallas import tpu as pltpu


# ----------------------------------------------------------------------------
# Phase-decomposition geometry (one spatial axis)
# ----------------------------------------------------------------------------
def _phase_geometry(k, s, p):
    """Unified sub-pixel tap window for one axis of a stride-s transposed conv."""
    m_min = -((k - 1 - p) // s)          # most-negative input offset (<= 0)
    m_max = (s - 1 + p) // s             # most-positive input offset
    taps = m_max - m_min + 1             # phase-independent window size T
    return m_min, taps


# ----------------------------------------------------------------------------
# Banded matmul weight:  (C_in, C_out, kH, kW)  ->  (T_h*W_p*C_in, s*W_q*s*C_out)
# such that  Y[qh, (rh,qw,rw,co)] = sum_{dh,wp,ci} x_pad[qh+dh, wp, ci] * B[...]
# equals the bias-free ConvTranspose2d output at oh = qh*s+rh, ow = qw*s+rw.
# ----------------------------------------------------------------------------
def _build_banded_weight(weight, *, stride, padding, w_p, w_q):
    c_in, c_out, k_h, k_w = weight.shape
    s, p = stride, padding
    mh_min, t_h = _phase_geometry(k_h, s, p)
    mw_min, t_w = _phase_geometry(k_w, s, p)

    # Per-phase sub-kernel, zero where a (tap, phase) combination is invalid.
    w32 = weight.astype(jnp.float32)
    wsub = jnp.zeros((t_h, t_w, s, s, c_in, c_out), jnp.float32)
    for dh in range(t_h):
        for rh in range(s):
            kh = rh + p - s * (dh + mh_min)
            if not 0 <= kh < k_h:
                continue
            for dw in range(t_w):
                for rw in range(s):
                    kw = rw + p - s * (dw + mw_min)
                    if not 0 <= kw < k_w:
                        continue
                    wsub = wsub.at[dh, dw, rh, rw].set(w32[:, :, kh, kw])

    # Band structure along the padded W axis: output column block qw reads wp = qw + dw.
    ind = np.zeros((w_p, w_q, t_w), np.float32)
    for qw in range(w_q):
        for dw in range(t_w):
            ind[qw + dw, qw, dw] = 1.0

    # B[dh, wp, ci, rh, qw, rw, co]
    b = jnp.einsum("wqd,hdrzio->hwirqzo", jnp.asarray(ind), wsub)
    return b.reshape(t_h * w_p * c_in, s * w_q * s * c_out)


# ----------------------------------------------------------------------------
# Kernel 1: transposed conv (phase form) + fused BN partial statistics
# ----------------------------------------------------------------------------
def _deconv_kernel(*refs, t_h, h_q, bn):
    # x_ref    : (1, H_p, W_p*C_in)  padded input, W*C folded onto the lane axis
    # w_ref    : (K, L)              banded weight, K = T_h*W_p*C_in, L = s*W_q*s*C_out
    # b_ref    : (1, L)              (bn=False only) bias tiled over (rh, qw, rw)
    # y_ref    : (1, H_q, L)         lane-dense phase-major output slab
    # stats_ref: (1, 2, L)           (bn=True only) column sums / sums of squares
    if bn:
        x_ref, w_ref, y_ref, stats_ref = refs
    else:
        x_ref, w_ref, b_ref, y_ref = refs

    xf = x_ref[0]                                        # (H_p, W_p*C_in)
    # im2col built ONCE: K axis ordered (dh, wp, ci) -- only T_h small row-shifted
    # slices, no per-tap patch materialization, no zero-dilated input.
    a = jnp.concatenate([xf[dh:dh + h_q, :] for dh in range(t_h)], axis=-1)
    # Single MXU matmul with f32 accumulation (K ~ 120, N = 256 lanes here).
    acc = jnp.dot(a, w_ref[...], preferred_element_type=jnp.float32)
    if not bn:
        acc = acc + b_ref[...]                           # bias only when no BN
    y_ref[0] = acc                                       # unmasked, lane-dense store

    if bn:
        # Fused BN partial stats (reduced over the qh rows); the remaining tiny
        # (N, rh, qw, rw) reduction over 2*L scalars happens in the wrapper.
        s1 = jnp.sum(acc, axis=0, keepdims=True)         # (1, L)
        s2 = jnp.sum(acc * acc, axis=0, keepdims=True)   # (1, L)
        stats_ref[0] = jnp.concatenate([s1, s2], axis=0)


# ----------------------------------------------------------------------------
# Kernel 2: cheap BN normalize pass (per-channel affine, lane-dense layout)
# ----------------------------------------------------------------------------
def _affine_kernel(y_ref, sc_ref, sh_ref, o_ref):
    # y_ref/o_ref: (1, H_q, L); sc/sh: (1, L) broadcast over the H_q rows.
    o_ref[0] = y_ref[0] * sc_ref[...] + sh_ref[...]


# ----------------------------------------------------------------------------
# Wrapper (layout glue only: transposes, padding, weight/bias/scale packing)
# ----------------------------------------------------------------------------
def deconv_forward(x_nchw, weight, bias, gamma, beta, *, stride, padding,
                   bn=True, eps=1e-5):
    """weight: (C_in, C_out, kH, kW) like nn.ConvTranspose2d. Returns NCHW."""
    n, c_in, h, w = x_nchw.shape
    w_cin, c_out, k_h, k_w = weight.shape
    assert w_cin == c_in
    s, p = stride, padding
    assert 0 <= p <= min(k_h, k_w) - 1, "padding > kernel-1 not handled"
    h_out = (h - 1) * s - 2 * p + k_h
    w_out = (w - 1) * s - 2 * p + k_w
    # TODO(synk): support (k - 2p) % s != 0 (ragged phases) if ever needed.
    assert (k_h - 2 * p) % s == 0 and (k_w - 2 * p) % s == 0, \
        "phase decomposition assumes H_out/W_out divisible by stride"
    h_q, w_q = h_out // s, w_out // s

    mh_min, t_h = _phase_geometry(k_h, s, p)
    mw_min, t_w = _phase_geometry(k_w, s, p)
    pad_h_lo, pad_w_lo = -mh_min, -mw_min
    pad_h_hi = max(0, h_q + t_h - 1 - pad_h_lo - h)
    pad_w_hi = max(0, w_q + t_w - 1 - pad_w_lo - w)
    h_p = h + pad_h_lo + pad_h_hi
    w_p = w + pad_w_lo + pad_w_hi

    # NCHW -> NHWC, pad (no zero-dilation), fold W*C_in onto the lane axis.
    x = jnp.transpose(x_nchw, (0, 2, 3, 1)).astype(jnp.float32)
    x = jnp.pad(x, ((0, 0), (pad_h_lo, pad_h_hi), (pad_w_lo, pad_w_hi), (0, 0)))
    x = x.reshape(n, h_p, w_p * c_in)

    b_mat = _build_banded_weight(weight, stride=s, padding=p, w_p=w_p, w_q=w_q)
    k2 = t_h * w_p * c_in
    l = s * w_q * s * c_out                  # lane-dense output width (256 here)
    assert b_mat.shape == (k2, l)

    kernel = partial(_deconv_kernel, t_h=t_h, h_q=h_q, bn=bn)
    in_specs = [
        pl.BlockSpec((1, h_p, w_p * c_in), lambda i: (i, 0, 0)),
        pl.BlockSpec((k2, l), lambda i: (0, 0)),
    ]
    inputs = [x, b_mat]
    if not bn:
        bias_l = jnp.broadcast_to(bias.astype(jnp.float32),
                                  (s, w_q, s, c_out)).reshape(1, l)
        in_specs.append(pl.BlockSpec((1, l), lambda i: (0, 0)))
        inputs.append(bias_l)

    if bn:
        out_shape = (jax.ShapeDtypeStruct((n, h_q, l), jnp.float32),
                     jax.ShapeDtypeStruct((n, 2, l), jnp.float32))
        out_specs = (pl.BlockSpec((1, h_q, l), lambda i: (i, 0, 0)),
                     pl.BlockSpec((1, 2, l), lambda i: (i, 0, 0)))
    else:
        out_shape = jax.ShapeDtypeStruct((n, h_q, l), jnp.float32)
        out_specs = pl.BlockSpec((1, h_q, l), lambda i: (i, 0, 0))

    conv = pl.pallas_call(
        kernel,
        out_shape=out_shape,
        grid=(n,),
        in_specs=in_specs,
        out_specs=out_specs,
        compiler_params=pltpu.CompilerParams(dimension_semantics=("parallel",)),
    )(*inputs)

    if bn:
        y_phase, stats = conv
        # Finish the tiny per-channel reduction (N*s*s terms per channel) and
        # fold (gamma, beta, mean, var) into a per-channel affine -- O(C) glue.
        col = stats.reshape(n, 2, s, w_q, s, c_out)
        s1 = jnp.sum(col[:, 0], axis=(0, 1, 2, 3))
        s2 = jnp.sum(col[:, 1], axis=(0, 1, 2, 3))
        cnt = float(n * h_out * w_out)
        mean = s1 / cnt
        var = jnp.maximum(s2 / cnt - mean * mean, 0.0)
        scale = gamma.astype(jnp.float32) * jax.lax.rsqrt(var + eps)
        shift = beta.astype(jnp.float32) - mean * scale
        scale_l = jnp.broadcast_to(scale, (s, w_q, s, c_out)).reshape(1, l)
        shift_l = jnp.broadcast_to(shift, (s, w_q, s, c_out)).reshape(1, l)

        out_phase = pl.pallas_call(
            _affine_kernel,
            out_shape=jax.ShapeDtypeStruct((n, h_q, l), jnp.float32),
            grid=(n,),
            in_specs=[
                pl.BlockSpec((1, h_q, l), lambda i: (i, 0, 0)),
                pl.BlockSpec((1, l), lambda i: (0, 0)),
                pl.BlockSpec((1, l), lambda i: (0, 0)),
            ],
            out_specs=pl.BlockSpec((1, h_q, l), lambda i: (i, 0, 0)),
            compiler_params=pltpu.CompilerParams(dimension_semantics=("parallel",)),
        )(y_phase, scale_l, shift_l)
    else:
        out_phase = conv

    # (N, H_q, (rh, qw, rw, co)) -> NHWC is a pure reshape (no interleave
    # transpose needed); only the final NHWC -> NCHW transpose remains.
    out_nhwc = out_phase.reshape(n, h_out, w_out, c_out)
    return jnp.transpose(out_nhwc, (0, 3, 1, 2))


# ----------------------------------------------------------------------------
# Pure-JAX references (correctness sanity check)
# ----------------------------------------------------------------------------
def _reference_conv_only(x_nchw, weight, bias, stride, padding):
    _, c_out, k_h, k_w = weight.shape
    x = jnp.transpose(x_nchw, (0, 2, 3, 1)).astype(jnp.float32)
    w_flip = jnp.transpose(weight[:, :, ::-1, ::-1], (2, 3, 0, 1)).astype(jnp.float32)
    ph, pw = k_h - 1 - padding, k_w - 1 - padding
    y = jax.lax.conv_general_dilated(
        x, w_flip, window_strides=(1, 1),
        padding=[(ph, ph), (pw, pw)], lhs_dilation=(stride, stride),
        dimension_numbers=("NHWC", "HWIO", "NHWC"),
    ) + bias.reshape(1, 1, 1, c_out)
    return jnp.transpose(y, (0, 3, 1, 2))


def _reference(x_nchw, weight, bias, gamma, beta, stride, padding, eps):
    y = jnp.transpose(_reference_conv_only(x_nchw, weight, bias, stride, padding),
                      (0, 2, 3, 1))
    mean = jnp.mean(y, axis=(0, 1, 2), keepdims=True)
    var = jnp.mean((y - mean) ** 2, axis=(0, 1, 2), keepdims=True)
    yn = (y - mean) * jax.lax.rsqrt(var + eps) * gamma.reshape(1, 1, 1, -1) \
         + beta.reshape(1, 1, 1, -1)
    return jnp.transpose(yn, (0, 3, 1, 2))


if __name__ == "__main__":
    # Deconv(dim_in=4, dim_out=8, kernel_size=4, stride=2, padding=1, bn=True)
    N, C_IN, H, W = 2, 4, 8, 8
    C_OUT, KS, STRIDE, PAD = 8, 4, 2, 1
    EPS = 1e-5

    key = jax.random.PRNGKey(0)
    kx, kw_, kb = jax.random.split(key, 3)
    x = jax.random.normal(kx, (N, C_IN, H, W), dtype=jnp.float32)
    weight = 0.1 * jax.random.normal(kw_, (C_IN, C_OUT, KS, KS), dtype=jnp.float32)
    bias = 0.1 * jax.random.normal(kb, (C_OUT,), dtype=jnp.float32)
    gamma = jnp.ones((C_OUT,), jnp.float32)     # BatchNorm2d default init
    beta = jnp.zeros((C_OUT,), jnp.float32)

    out = deconv_forward(x, weight, bias, gamma, beta,
                         stride=STRIDE, padding=PAD, bn=True, eps=EPS)
    out = jax.block_until_ready(out)
    ref = _reference(x, weight, bias, gamma, beta, STRIDE, PAD, EPS)
    assert out.shape == (N, C_OUT, (H - 1) * STRIDE - 2 * PAD + KS,
                         (W - 1) * STRIDE - 2 * PAD + KS)
    assert jnp.allclose(out, ref, atol=1e-3, rtol=1e-3), "bn=True mismatch vs reference"

    # Also exercise the bn=False (conv + bias only) path.
    out2 = deconv_forward(x, weight, bias, gamma, beta,
                          stride=STRIDE, padding=PAD, bn=False)
    out2 = jax.block_until_ready(out2)
    ref2 = _reference_conv_only(x, weight, bias, STRIDE, PAD)
    assert jnp.allclose(out2, ref2, atol=1e-3, rtol=1e-3), "bn=False mismatch vs reference"

    print("KERNEL_OK")
</pallas_src>

<mosaic_0001>
module attributes {stable_mosaic.version = 11 : i64} {
  func.func @_deconv_kernel(%arg0: i32, %arg1: memref<1x10x40xf32, #tpu.memory_space<vmem>>, %arg2: memref<120x256xf32, #tpu.memory_space<vmem>>, %arg3: memref<1x8x256xf32, #tpu.memory_space<vmem>>, %arg4: memref<1x2x256xf32, #tpu.memory_space<vmem>>) attributes {dimension_semantics = [#tpu.dimension_semantics<parallel>], iteration_bounds = array<i64: 2>, scalar_prefetch = 0 : i64, scratch_operands = 0 : i64, tpu.core_type = #tpu.core_type<tc>, window_params = [{transform_indices = @transform_0, window_bounds = array<i64: 1, 10, 40>}, {pipeline_mode = #tpu.pipeline_mode<synchronous>, transform_indices = @transform_1, window_bounds = array<i64: 120, 256>}, {transform_indices = @transform_2, window_bounds = array<i64: 1, 8, 256>}, {transform_indices = @transform_3, window_bounds = array<i64: 1, 2, 256>}]} {
    %c0 = arith.constant 0 : index
    %c0_0 = arith.constant 0 : index
    %c0_1 = arith.constant 0 : index
    %0 = vector.load %arg1[%c0, %c0_0, %c0_1] : memref<1x10x40xf32, #tpu.memory_space<vmem>>, vector<1x10x40xf32>
    %1 = vector.shape_cast %0 : vector<1x10x40xf32> to vector<10x40xf32>
    %2 = vector.extract_strided_slice %1 {offsets = [0, 0], sizes = [8, 40], strides = [1, 1]} : vector<10x40xf32> to vector<8x40xf32>
    %3 = vector.extract_strided_slice %1 {offsets = [1, 0], sizes = [8, 40], strides = [1, 1]} : vector<10x40xf32> to vector<8x40xf32>
    %4 = vector.extract_strided_slice %1 {offsets = [2, 0], sizes = [8, 40], strides = [1, 1]} : vector<10x40xf32> to vector<8x40xf32>
    %5 = tpu.concatenate %2, %3, %4 in 1 : vector<8x40xf32>, vector<8x40xf32>, vector<8x40xf32> -> vector<8x120xf32>
    %c0_2 = arith.constant 0 : index
    %c0_3 = arith.constant 0 : index
    %6 = vector.load %arg2[%c0_2, %c0_3] : memref<120x256xf32, #tpu.memory_space<vmem>>, vector<120x256xf32>
    %cst = arith.constant dense<0.000000e+00> : vector<8x256xf32>
    %7 = tpu.matmul %5, %6, %cst {dimension_numbers = #tpu.dot_dimension_numbers<[1], [0], [0], [1], [0, 0, 1, 1], [], []>} : vector<8x120xf32>, vector<120x256xf32>, vector<8x256xf32> -> vector<8x256xf32>
    %c0_4 = arith.constant 0 : index
    %c0_5 = arith.constant 0 : index
    %c0_6 = arith.constant 0 : index
    %8 = vector.load %arg3[%c0_4, %c0_5, %c0_6] : memref<1x8x256xf32, #tpu.memory_space<vmem>>, vector<1x8x256xf32>
    %9 = vector.shape_cast %8 : vector<1x8x256xf32> to vector<8x256xf32>
    %10 = vector.shape_cast %7 : vector<8x256xf32> to vector<1x8x256xf32>
    tpu.vector_store %arg3[%c0_4, %c0_5, %c0_6], %10 {strides = array<i32>} : memref<1x8x256xf32, #tpu.memory_space<vmem>>, vector<1x8x256xf32>,
    %cst_7 = arith.constant dense<0.000000e+00> : vector<256xf32>
    %11 = vector.multi_reduction <add>, %7, %cst_7 [0] : vector<8x256xf32> to vector<256xf32>
    %12 = vector.shape_cast %11 : vector<256xf32> to vector<1x256xf32>
    %13 = arith.mulf %7, %7 : vector<8x256xf32>
    %cst_8 = arith.constant dense<0.000000e+00> : vector<256xf32>
    %14 = vector.multi_reduction <add>, %13, %cst_8 [0] : vector<8x256xf32> to vector<256xf32>
    %15 = vector.shape_cast %14 : vector<256xf32> to vector<1x256xf32>
    %16 = tpu.concatenate %12, %15 in 0 : vector<1x256xf32>, vector<1x256xf32> -> vector<2x256xf32>
    %c0_9 = arith.constant 0 : index
    %c0_10 = arith.constant 0 : index
    %c0_11 = arith.constant 0 : index
    %17 = vector.load %arg4[%c0_9, %c0_10, %c0_11] : memref<1x2x256xf32, #tpu.memory_space<vmem>>, vector<1x2x256xf32>
    %18 = vector.shape_cast %17 : vector<1x2x256xf32> to vector<2x256xf32>
    %19 = vector.shape_cast %16 : vector<2x256xf32> to vector<1x2x256xf32>
    tpu.vector_store %arg4[%c0_9, %c0_10, %c0_11], %19 {strides = array<i32>} : memref<1x2x256xf32, #tpu.memory_space<vmem>>, vector<1x2x256xf32>,
    return
  }
  func.func @transform_0(%arg0: i32) -> (i32, i32, i32) {
    %c0_i32 = arith.constant 0 : i32
    %c0_i32_0 = arith.constant 0 : i32
    %c0_i32_1 = arith.constant 0 : i32
    return %arg0, %c0_i32, %c0_i32_0 : i32, i32, i32
  }
  func.func @transform_1(%arg0: i32) -> (i32, i32) {
    %c0_i32 = arith.constant 0 : i32
    %c0_i32_0 = arith.constant 0 : i32
    %c0_i32_1 = arith.constant 0 : i32
    return %c0_i32, %c0_i32_0 : i32, i32
  }
  func.func @transform_2(%arg0: i32) -> (i32, i32, i32) {
    %c0_i32 = arith.constant 0 : i32
    %c0_i32_0 = arith.constant 0 : i32
    %c0_i32_1 = arith.constant 0 : i32
    return %arg0, %c0_i32, %c0_i32_0 : i32, i32, i32
  }
  func.func @transform_3(%arg0: i32) -> (i32, i32, i32) {
    %c0_i32 = arith.constant 0 : i32
    %c0_i32_0 = arith.constant 0 : i32
    %c0_i32_1 = arith.constant 0 : i32
    return %arg0, %c0_i32, %c0_i32_0 : i32, i32, i32
  }
}

</mosaic_0001>

<llo_original>
// kernel: tpu_custom_call.1
$region0: #{tpu_custom_call.1}
  #allocation0 [shape = 'u32[]', space=smem, size = 0x4, offset = 0x4, fixed_abs, tag = 'smem constant byte address 0x4 - core index']
  #allocation1 [shape = 'u32[144,128]{1,0:T(1,128)}', space=vmem, size = 0x12000, scoped, tag = 'internal scratch']
  %s0 = inlined_call_operand.vmem [shape: f32[2,10,40], index: 0, kind: input, shape index: {}]
  %s1 = inlined_call_operand.hbm [shape: f32[120,256], index: 1, kind: input, shape index: {}]
  %s2 = inlined_call_operand.hbm [shape: f32[2,8,256], index: 2, kind: output, shape index: {0}]
  %s3 = inlined_call_operand.hbm [shape: f32[2,2,256], index: 3, kind: output, shape index: {1}]
  %4 = xla_tuple %s2, %s3
  %s5 = sld [smem:[#allocation0]]
  $region53: #{tpu_custom_call.1} parent=0
    _
  %s7 = ssub.s32 1, %s5
  %s8 = scalar_select 0, %s7, %s5
  $region1: #{tpu_custom_call.1} parent=0
    #allocation2 [shape = 'u8[122880]{0}', space=vmem, size = 0x1e000, scoped, tag = 'input window, operand 1, single buffered']
    #allocation3 [shape = 's32[2]{0}', space=sflag, size = 0x8, scoped, tag = 'scoped memory for tpu_custom_call.1']
    #allocation4 [shape = 's32[2]{0}', space=sflag, size = 0x8, scoped, tag = 'scoped memory for tpu_custom_call.1']
    #allocation5 [shape = 'u8[16384]{0}', space=vmem, size = 0x4000, scoped, tag = 'output window, operand 0']
    #allocation6 [shape = 'u8[4096]{0}', space=vmem, size = 0x1000, scoped, tag = 'output window, operand 1']
    #allocation7 [shape = 's32[2]{0}', space=sflag, size = 0x8, scoped, tag = 'scoped memory for tpu_custom_call.1']
    %9 = vsyncpa [#allocation3], 0
    %10 = vsyncpa [#allocation4], 0
    %s11 = scalar_lea.sflag [#allocation4], 1
    %12 = vsyncpa %s11, 0
    %13 = vsyncpa [#allocation7], 0
    %s14 = scalar_lea.sflag [#allocation7], 1
    %15 = vsyncpa %s14, 0
    loop: start=0, step=1, limit=4
    $region2: #{tpu_custom_call.1} parent=1 // loop_pre_header
      _
    $region3: #{tpu_custom_call.1} parent=1 // loop_header
      %s17 = sphi 0, %s21
      %p18 = scmp.ge.s32.totalorder %s17, 4
      %s27 = sphi 0, %s29
      %s30 = sphi 0, %s27
      %s31 = sphi 0, %s30
      %s47 = sphi 0, %s31
      %s51 = sphi 0, %s51
      %s53 = sphi 0, %s51
      %s54 = sphi 0, %s53
      %s68 = sphi 0, %s54
      %s74 = sphi 0, %s76
      %s77 = sphi 0, %s74
      %s78 = sphi 0, %s77
      %s94 = sphi 0, %s78
      %s100 = sphi 0, %s102
      %s103 = sphi 0, %s100
      %s104 = sphi 0, %s103
      %s120 = sphi 0, %s104
    $region4: #{tpu_custom_call.1} parent=1 // loop_header_branch
      %20 = sbr.rel (%p18) target = $region8
    $region5: #{tpu_custom_call.1} parent=1 // loop_body
      %s22 = ssub.s32 %s17, 1
      %s23 = ssub.s32 %s17, 2
      %s24 = sadd.s32 %s17, 1
      %s25 = ssub.s32 %s17, %s24
      %p26 = scmp.eq.s32.totalorder %s25, 0
      %s28 = sadd.s32 %s27, 1
      %s29 = scalar_select %p26, %s27, %s28
      %p32 = pneg %p26
      %p33 = scmp.eq.s32.totalorder %s17, 1
      %p34 = por %p32, %p33
      %p35 = scmp.ne.s32.totalorder %s27, %s30
      %p36 = scmp.eq.s32.totalorder %s17, 0
      %p37 = por %p35, %p36
      %p38 = scmp.ne.s32.totalorder %s27, %s30
      %p39 = scmp.eq.s32.totalorder %s22, 1
      %p40 = por %p38, %p39
      %p41 = scmp.ne.s32.totalorder %s30, %s31
      %p42 = scmp.eq.s32.totalorder %s22, 0
      %p43 = por %p41, %p42
      %p44 = scmp.ne.s32.totalorder %s30, %s31
      %p45 = scmp.eq.s32.totalorder %s23, 1
      %p46 = por %p44, %p45
      %p48 = scmp.ne.s32.totalorder %s31, %s47
      %p49 = scmp.eq.s32.totalorder %s23, 0
      %p50 = por %p48, %p49
      %s52 = sadd.s32 %s51, 1
      %p55 = scmp.eq.s32.totalorder %s17, 1
      %p56 = scmp.ne.s32.totalorder %s51, %s53
      %p57 = scmp.eq.s32.totalorder %s17, 0
      %p58 = por %p56, %p57
      %p59 = scmp.ne.s32.totalorder %s51, %s53
      %p60 = scmp.eq.s32.totalorder %s22, 1
      %p61 = por %p59, %p60
      %p62 = scmp.ne.s32.totalorder %s53, %s54
      %p63 = scmp.eq.s32.totalorder %s22, 0
      %p64 = por %p62, %p63
      %p65 = scmp.ne.s32.totalorder %s53, %s54
      %p66 = scmp.eq.s32.totalorder %s23, 1
      %p67 = por %p65, %p66
      %p69 = scmp.ne.s32.totalorder %s54, %s68
      %p70 = scmp.eq.s32.totalorder %s23, 0
      %p71 = por %p69, %p70
      %s72 = ssub.s32 %s17, %s24
      %p73 = scmp.eq.s32.totalorder %s72, 0
      %s75 = sadd.s32 %s74, 1
      %s76 = scalar_select %p73, %s74, %s75
      %p79 = pneg %p73
      %p80 = scmp.eq.s32.totalorder %s17, 1
      %p81 = por %p79, %p80
      %p82 = scmp.ne.s32.totalorder %s74, %s77
      %p83 = scmp.eq.s32.totalorder %s17, 0
      %p84 = por %p82, %p83
      %p85 = scmp.ne.s32.totalorder %s74, %s77
      %p86 = scmp.eq.s32.totalorder %s22, 1
      %p87 = por %p85, %p86
      %p88 = scmp.ne.s32.totalorder %s77, %s78
      %p89 = scmp.eq.s32.totalorder %s22, 0
      %p90 = por %p88, %p89
      %p91 = scmp.ne.s32.totalorder %s77, %s78
      %p92 = scmp.eq.s32.totalorder %s23, 1
      %p93 = por %p91, %p92
      %p95 = scmp.ne.s32.totalorder %s78, %s94
      %p96 = scmp.eq.s32.totalorder %s23, 0
      %p97 = por %p95, %p96
      %s98 = ssub.s32 %s17, %s24
      %p99 = scmp.eq.s32.totalorder %s98, 0
      %s101 = sadd.s32 %s100, 1
      %s102 = scalar_select %p99, %s100, %s101
      %p105 = pneg %p99
      %p106 = scmp.eq.s32.totalorder %s17, 1
      %p107 = por %p105, %p106
      %p108 = scmp.ne.s32.totalorder %s100, %s103
      %p109 = scmp.eq.s32.totalorder %s17, 0
      %p110 = por %p108, %p109
      %p111 = scmp.ne.s32.totalorder %s100, %s103
      %p112 = scmp.eq.s32.totalorder %s22, 1
      %p113 = por %p111, %p112
      %p114 = scmp.ne.s32.totalorder %s103, %s104
      %p115 = scmp.eq.s32.totalorder %s22, 0
      %p116 = por %p114, %p115
      %p117 = scmp.ne.s32.totalorder %s103, %s104
      %p118 = scmp.eq.s32.totalorder %s23, 1
      %p119 = por %p117, %p118
      %p121 = scmp.ne.s32.totalorder %s104, %s120
      %p122 = scmp.eq.s32.totalorder %s23, 0
      %p123 = por %p121, %p122
      %p124 = scmp.le.s32.totalorder 1, %s17
      %p125 = scmp.lt.s32.totalorder %s17, 3
      %p126 = pnand %p124, %p125
      %p127 = pneg %p126
      // Predicated region
      $region9: #{tpu_custom_call.1} parent=5 // pred_check
        _
      $region10: #{tpu_custom_call.1} parent=5 // pred_check_branch
        %129 = sbr.rel (%p126) target = $region12
      $region11: #{tpu_custom_call.1} parent=5 // pred_region
        %s130 = ssub.s32 %s17, 1
        // Predicated region
        $region13: #{tpu_custom_call.1} parent=11 // pred_check
          %p131 = pneg %p64
        $region14: #{tpu_custom_call.1} parent=11 // pred_check_branch
          %133 = sbr.rel (%p131) target = $region16
        $region15: #{tpu_custom_call.1} parent=11 // pred_region
          %s135 = ssub.s32 3840, 3840
          %136 = vsyncadd [#allocation3], %s135
          %s137 = sshll.u32 [#allocation2], 4
          %s138 = int_to_ptr.vmem [resolvable:$true] %s137
          %143 = dma.hbm_to_vmem [thread:$0]  %s1, 3840, %s138, [#allocation3], 256, 256, 16
        $region16: #{tpu_custom_call.1} parent=11 // pred_fallthru
          _
      $region12: #{tpu_custom_call.1} parent=5 // pred_fallthru
        _
      %p144 = scmp.lt.s32.totalorder %s17, 2
      // Predicated region
      $region17: #{tpu_custom_call.1} parent=5 // pred_check
        %p145 = pneg %p144
      $region18: #{tpu_custom_call.1} parent=5 // pred_check_branch
        %147 = sbr.rel (%p145) target = $region20
      $region19: #{tpu_custom_call.1} parent=5 // pred_region
        // Predicated region
        $region21: #{tpu_custom_call.1} parent=19 // pred_check
          %p148 = pneg %p37
        $region22: #{tpu_custom_call.1} parent=19 // pred_check_branch
          %150 = sbr.rel (%p148) target = $region24
        $region23: #{tpu_custom_call.1} parent=19 // pred_region
          %p151 = scmp.lt.s32.totalorder %s17, 1
          %s152 = scalar_select %p151, %s17, 1
          %s153 = smul.addr %s152, 2
          %s154 = smul.addr %s153, 8
          %s155 = scalar_lea.vmem %s0, %s154
        $region24: #{tpu_custom_call.1} parent=19 // pred_fallthru
          _
      $region20: #{tpu_custom_call.1} parent=5 // pred_fallthru
        _
      %p156 = scmp.le.s32.totalorder 1, %s17
      %p157 = scmp.lt.s32.totalorder %s17, 3
      %p158 = pnand %p156, %p157
      %p159 = pneg %p158
      // Predicated region
      $region25: #{tpu_custom_call.1} parent=5 // pred_check
        _
      $region26: #{tpu_custom_call.1} parent=5 // pred_check_branch
        %161 = sbr.rel (%p158) target = $region28
      $region27: #{tpu_custom_call.1} parent=5 // pred_region
        %s162 = ssub.s32 %s17, 1
        // Predicated region
        $region29: #{tpu_custom_call.1} parent=27 // pred_check
          %p163 = pneg %p64
        $region30: #{tpu_custom_call.1} parent=27 // pred_check_branch
          %165 = sbr.rel (%p163) target = $region32
        $region31: #{tpu_custom_call.1} parent=27 // pred_region
          %166 = dma.done [#allocation3], 3840
        $region32: #{tpu_custom_call.1} parent=27 // pred_fallthru
          _
        %p167 = scmp.lt.s32.totalorder %s22, 1
        %s168 = scalar_select %p167, %s22, 1
        %s169 = smul.addr %s168, 2
        %s170 = smul.addr %s169, 8
        %s171 = scalar_lea.vmem %s0, %s170
        %p172 = pneg %p43
        %p173 = pneg %p40
        %p174 = pneg %p64
        %p175 = pneg %p61
        %p176 = pneg %p90
        %p177 = pneg %p87
        %s178 = sand.u32 %s77, 1
        %s179 = scalar_lea.sflag [#allocation4], %s178
        %s180 = sand.u32 %s77, 1
        %s181 = smul.addr %s180, 16
        %s182 = scalar_lea.vmem [#allocation5], %s181
        %p183 = pneg %p116
        %p184 = pneg %p113
        %s185 = sand.u32 %s103, 1
        %s186 = scalar_lea.sflag [#allocation7], %s185
        %s187 = sand.u32 %s103, 1
        %s188 = smul.addr %s187, 4
        %s189 = scalar_lea.vmem [#allocation6], %s188
        %p190 = scmp.lt.s32.totalorder %s22, 1
        %s191 = scalar_select %p190, %s22, 1
        %s192 = smul.addr %s191, 2
        %s193 = smul.addr %s192, 8
        %s194 = scalar_lea.vmem %s0, %s193
        %v195 = vld [vmem:[%s194] sm:$0xff]
        %v196 = vld [vmem:[%s194 + $0x8] sm:$0x3]
        %vm199 = vcmask 1046528
        %v200 = vrot.slane %v195, 1
        %v201 = vrot.slane %v196, 1
        %v202 = vsel %vm199, %v200, %v201
        %203 = vrot.lane.b32.xlu0 %v202, 40
        %v204 = vpop.permute.xlu0 %203
        %vm206 = vcmask 1045504
        %v207 = vrot.slane %v195, 2
        %v208 = vrot.slane %v196, 2
        %v209 = vsel %vm206, %v207, %v208
        %210 = vrot.lane.b32.xlu0 %v209, 80
        %v211 = vpop.permute.xlu0 %210
        %vm213 = vcmask 326656
        %v214 = vsel %vm213, %v195, %v204
        %vm215 = vcmask 654336
        %v216 = vsel %vm215, %v214, %v211
        %v217 = vld [vmem:[#allocation2] sm:$0xff]
        %v218 = vld [vmem:[#allocation2 + $0x8] sm:$0xff]
        %v219 = vld [vmem:[#allocation2 + $0x10] sm:$0xff]
        %v220 = vld [vmem:[#allocation2 + $0x18] sm:$0xff]
        %v221 = vld [vmem:[#allocation2 + $0x20] sm:$0xff]
        %v222 = vld [vmem:[#allocation2 + $0x28] sm:$0xff]
        %v223 = vld [vmem:[#allocation2 + $0x30] sm:$0xff]
        %v224 = vld [vmem:[#allocation2 + $0x38] sm:$0xff]
        %v225 = vld [vmem:[#allocation2 + $0x40] sm:$0xff]
        %v226 = vld [vmem:[#allocation2 + $0x48] sm:$0xff]
        %v227 = vld [vmem:[#allocation2 + $0x50] sm:$0xff]
        %v228 = vld [vmem:[#allocation2 + $0x58] sm:$0xff]
        %v229 = vld [vmem:[#allocation2 + $0x60] sm:$0xff]
        %v230 = vld [vmem:[#allocation2 + $0x68] sm:$0xff]
        %v231 = vld [vmem:[#allocation2 + $0x70] sm:$0xff]
        %v232 = vld [vmem:[#allocation2 + $0x78] sm:$0xff]
        %v233 = vld [vmem:[#allocation2 + $0x80] sm:$0xff]
        %v234 = vld [vmem:[#allocation2 + $0x88] sm:$0xff]
        %v235 = vld [vmem:[#allocation2 + $0x90] sm:$0xff]
        %v236 = vld [vmem:[#allocation2 + $0x98] sm:$0xff]
        %v237 = vld [vmem:[#allocation2 + $0xa0] sm:$0xff]
        %v238 = vld [vmem:[#allocation2 + $0xa8] sm:$0xff]
        %v239 = vld [vmem:[#allocation2 + $0xb0] sm:$0xff]
        %v240 = vld [vmem:[#allocation2 + $0xb8] sm:$0xff]
        %v241 = vld [vmem:[#allocation2 + $0xc0] sm:$0xff]
        %v242 = vld [vmem:[#allocation2 + $0xc8] sm:$0xff]
        %v243 = vld [vmem:[#allocation2 + $0xd0] sm:$0xff]
        %v244 = vld [vmem:[#allocation2 + $0xd8] sm:$0xff]
        %v245 = vld [vmem:[#allocation2 + $0xe0] sm:$0xff]
        %v246 = vld [vmem:[#allocation2 + $0xe8] sm:$0xff]
        %vm247 = vcmask 982016
        %v249 = vsel %vm247, %v216, 0
        %251 = vmatprep.subr.mxu0 %v218
        %252 = vmatpush1.msra.mxu0 %v217
        %253 = vmatprep.subr.mxu0 %v220
        %254 = vmatpush1.msra.mxu0 %v219
        %255 = vmatprep.subr.mxu0 %v222
        %256 = vmatpush1.msra.mxu0 %v221
        %257 = vmatprep.subr.mxu0 %v224
        %258 = vmatpush1.msra.mxu0 %v223
        %259 = vmatprep.subr.mxu0 %v226
        %260 = vmatpush1.msra.mxu0 %v225
        %261 = vmatprep.subr.mxu0 %v228
        %262 = vmatpush1.msra.mxu0 %v227
        %263 = vmatprep.subr.mxu0 %v230
        %264 = vmatpush1.msra.mxu0 %v229
        %265 = vmatprep.subr.mxu0 %v232
        %266 = vmatpush1.msra.mxu0 %v231
        %267 = vmatprep.subr.mxu0 %v234
        %268 = vmatpush1.msra.mxu0 %v233
        %269 = vmatprep.subr.mxu0 %v236
        %270 = vmatpush1.msra.mxu0 %v235
        %271 = vmatprep.subr.mxu0 %v238
        %272 = vmatpush1.msra.mxu0 %v237
        %273 = vmatprep.subr.mxu0 %v240
        %274 = vmatpush1.msra.mxu0 %v239
        %275 = vmatprep.subr.mxu0 %v242
        %276 = vmatpush1.msra.mxu0 %v241
        %277 = vmatprep.subr.mxu0 %v244
        %278 = vmatpush1.msra.mxu0 %v243
        %279 = vmatprep.subr.mxu0 %v246
        %280 = vmatpush1.msra.mxu0 %v245
        %281 = vmatprep.subr.mxu0 0.0
        %282 = vmatpush1.msra.mxu0 0.0
        %283 = vmatprep.subr.mxu0 0.0
        %284 = vmatpush1.msra.mxu0 0.0
        %285 = vmatprep.subr.mxu0 0.0
        %286 = vmatpush1.msra.mxu0 0.0
        %287 = vmatprep.subr.mxu0 0.0
        %288 = vmatpush1.msra.mxu0 0.0
        %289 = vmatprep.subr.mxu0 0.0
        %290 = vmatpush1.msra.mxu0 0.0
        %291 = vmatprep.subr.mxu0 0.0
        %292 = vmatpush1.msra.mxu0 0.0
        %293 = vmatprep.subr.mxu0 0.0
        %294 = vmatpush1.msra.mxu0 0.0
        %295 = vmatprep.subr.mxu0 0.0
        %296 = vmatpush1.msra.mxu0 0.0
        %297 = vmatprep.subr.mxu0 0.0
        %298 = vmatpush1.msra.mxu0 0.0
        %299 = vmatprep.subr.mxu0 0.0
        %300 = vmatpush1.msra.mxu0 0.0
        %301 = vmatprep.subr.mxu0 0.0
        %302 = vmatpush1.msra.mxu0 0.0
        %303 = vmatprep.subr.mxu0 0.0
        %304 = vmatpush1.msra.mxu0 0.0
        %305 = vmatprep.subr.mxu0 0.0
        %306 = vmatpush1.msra.mxu0 0.0
        %307 = vmatprep.subr.mxu0 0.0
        %308 = vmatpush1.msra.mxu0 0.0
        %309 = vmatprep.subr.mxu0 0.0
        %310 = vmatpush1.msra.mxu0 0.0
        %311 = vmatprep.subr.mxu0 0.0
        %312 = vmatpush1.msra.mxu0 0.0
        %313 = vmatprep.subr.mxu0 0.0
        %314 = vmatpush1.msra.mxu0 0.0
        %315 = vmatprep.mubr.f32.mxu0 0.0
        %316 = vmatmul.mubr.f32.gmra.mrb[0].mxu0 %v249
        %v317 = vpop.f32.mrb[0].mxu0
        %v318 = vadd.f32 0.0, %v317
        %v319 = vpop.f32.mrb[0].mxu0
        %v320 = vadd.f32 0.0, %v319
        %321 = vdwg.mxu0
        %322 = vst [vmem:[%s182] sm:$0xff] %v318
        %323 = vst [vmem:[%s182 + $0x8] sm:$0xff] %v320
        %v324 = vrot.slane %v318, 4
        %v325 = vadd.f32 %v318, %v324
        %v326 = vrot.slane %v325, 2
        %v327 = vadd.f32 %v325, %v326
        %v328 = vrot.slane %v327, 1
        %v329 = vadd.f32 %v327, %v328
        %v330 = vrot.slane %v320, 4
        %v331 = vadd.f32 %v320, %v330
        %v332 = vrot.slane %v331, 2
        %v333 = vadd.f32 %v331, %v332
        %v334 = vrot.slane %v333, 1
        %v335 = vadd.f32 %v333, %v334
        %v336 = vmul.f32 %v318, %v318
        %v337 = vmul.f32 %v320, %v320
        %v338 = vrot.slane %v336, 4
        %v339 = vadd.f32 %v336, %v338
        %v340 = vrot.slane %v339, 2
        %v341 = vadd.f32 %v339, %v340
        %v342 = vrot.slane %v341, 1
        %v343 = vadd.f32 %v341, %v342
        %v344 = vrot.slane %v337, 4
        %v345 = vadd.f32 %v337, %v344
        %v346 = vrot.slane %v345, 2
        %v347 = vadd.f32 %v345, %v346
        %v348 = vrot.slane %v347, 1
        %v349 = vadd.f32 %v347, %v348
        %vm350 = vcmask 1040384
        %v351 = vsel %vm350, %v329, %v343
        %v352 = vsel %vm350, %v335, %v349
        %v355 = vcombine.low %v351, %v352
        %v357 = vunpack.c.l.s4 1983009808
        %v358 = vunpack.c.0.s8 %v357
        %v359 = vlaneseq
        %v360 = vshrl.u32 %v359, 7
        %v361 = vsub.s32 %v358, %v360
        %v362 = vrot.slane %v355, %v361
        %364 = vst [vmem:[%s189] sm:$0xf] %v362
        %s365 = sand.u32 %s77, 1
        %s366 = scalar_lea.sflag [#allocation4], %s365
        %s367 = sand.u32 %s77, 1
        %s368 = smul.addr %s367, 16
        %s369 = scalar_lea.vmem [#allocation5], %s368
        %s370 = sand.u32 %s103, 1
        %s371 = scalar_lea.sflag [#allocation7], %s370
        %s372 = sand.u32 %s103, 1
        %s373 = smul.addr %s372, 4
        %s374 = scalar_lea.vmem [#allocation6], %s373
        // Predicated region
        $region33: #{tpu_custom_call.1} parent=27 // pred_check
          %p375 = pneg %p87
        $region34: #{tpu_custom_call.1} parent=27 // pred_check_branch
          %377 = sbr.rel (%p375) target = $region36
        $region35: #{tpu_custom_call.1} parent=27 // pred_region
          %s379 = ssub.s32 256, 256
          %380 = vsyncadd %s366, %s379
          %s381 = smul.addr %s22, 2
          %s382 = smul.addr %s381, 128
          %s383 = scalar_lea.hbm %s2, %s382
          %s385 = sshll.u32 %s369, 4
          %s386 = int_to_ptr.vmem [resolvable:$true] %s385
          %388 = dma.vmem_to_hbm [thread:$0]  %s386, 256, %s383, %s366
        $region36: #{tpu_custom_call.1} parent=27 // pred_fallthru
          _
        // Predicated region
        $region37: #{tpu_custom_call.1} parent=27 // pred_check
          %p389 = pneg %p113
        $region38: #{tpu_custom_call.1} parent=27 // pred_check_branch
          %391 = sbr.rel (%p389) target = $region40
        $region39: #{tpu_custom_call.1} parent=27 // pred_region
          %s393 = ssub.s32 64, 64
          %394 = vsyncadd %s371, %s393
          %s395 = smul.addr %s22, 2
          %s396 = smul.addr %s395, 32
          %s397 = scalar_lea.hbm %s3, %s396
          %s399 = sshll.u32 %s374, 4
          %s400 = int_to_ptr.vmem [resolvable:$true] %s399
          %402 = dma.vmem_to_hbm [thread:$0]  %s400, 64, %s397, %s371
        $region40: #{tpu_custom_call.1} parent=27 // pred_fallthru
          _
      $region28: #{tpu_custom_call.1} parent=5 // pred_fallthru
        _
      %p403 = scmp.le.s32.totalorder 2, %s17
      // Predicated region
      $region41: #{tpu_custom_call.1} parent=5 // pred_check
        %p404 = pneg %p403
      $region42: #{tpu_custom_call.1} parent=5 // pred_check_branch
        %406 = sbr.rel (%p404) target = $region44
      $region43: #{tpu_custom_call.1} parent=5 // pred_region
        %s407 = ssub.s32 %s17, 2
        // Predicated region
        $region45: #{tpu_custom_call.1} parent=43 // pred_check
          %p408 = pneg %p93
        $region46: #{tpu_custom_call.1} parent=43 // pred_check_branch
          %410 = sbr.rel (%p408) target = $region48
        $region47: #{tpu_custom_call.1} parent=43 // pred_region
          %s411 = sand.u32 %s78, 1
          %s412 = scalar_lea.sflag [#allocation4], %s411
          %s413 = sand.u32 %s78, 1
          %s414 = smul.addr %s413, 16
          %s415 = scalar_lea.vmem [#allocation5], %s414
          %416 = dma.done %s412, 256
        $region48: #{tpu_custom_call.1} parent=43 // pred_fallthru
          _
        // Predicated region
        $region49: #{tpu_custom_call.1} parent=43 // pred_check
          %p417 = pneg %p119
        $region50: #{tpu_custom_call.1} parent=43 // pred_check_branch
          %419 = sbr.rel (%p417) target = $region52
        $region51: #{tpu_custom_call.1} parent=43 // pred_region
          %s420 = sand.u32 %s104, 1
          %s421 = scalar_lea.sflag [#allocation7], %s420
          %s422 = sand.u32 %s104, 1
          %s423 = smul.addr %s422, 4
          %s424 = scalar_lea.vmem [#allocation6], %s423
          %425 = dma.done %s421, 64
        $region52: #{tpu_custom_call.1} parent=43 // pred_fallthru
          _
      $region44: #{tpu_custom_call.1} parent=5 // pred_fallthru
        _
    $region6: #{tpu_custom_call.1} parent=1 // loop_footer
      %s21 = sadd.s32 1, %s17
    $region7: #{tpu_custom_call.1} parent=1 // loop_footer_branch
      %16 = sbr.rel target = $region3
    $region8: #{tpu_custom_call.1} parent=1 // loop_exit
      _
    %426 = vsyncpa [#allocation3], 1
    %s427 = scalar_lea.sflag [#allocation3], 1
    %428 = vsyncpa %s427, 1
    %429 = vsyncpa [#allocation4], 1
    %s430 = scalar_lea.sflag [#allocation4], 1
    %431 = vsyncpa %s430, 1
    %432 = vsyncpa [#allocation7], 1
    %s433 = scalar_lea.sflag [#allocation7], 1
    %434 = vsyncpa %s433, 1

</llo_original>
